<compile_context>
chip_gen: v7x
topology: tpu7x:2x2x1
jax: 0.10.0
libtpu: 0.0.40
codegen_flags: <defaults>
</compile_context>

<pallas_src>
import functools

import jax
import jax.numpy as jnp
from jax.experimental import pallas as pl
from jax.experimental.pallas import tpu as pltpu

EPS = 1e-5


def _round_up(x, m):
    return (x + m - 1) // m * m


# ---------------------------------------------------------------------------
# Kernels (fused one-pass statistics; normalization axis never re-centers x)
# ---------------------------------------------------------------------------

def _ln_kernel_c_on_lanes(x_ref, w_ref, o_ref, *, inv_c):
    # x_ref: (TILE_R, C)   w_ref: (1, C)   o_ref: (TILE_R, C)
    x = x_ref[...].astype(jnp.float32)
    w = w_ref[...].astype(jnp.float32)
    s1 = jnp.sum(x, axis=-1, keepdims=True)
    s2 = jnp.sum(x * x, axis=-1, keepdims=True)
    mean = s1 * inv_c
    var = jnp.maximum(s2 * inv_c - mean * mean, 0.0)   # unbiased=False
    inv = jax.lax.rsqrt(var + EPS)                     # EUP slot
    o_ref[...] = (x * inv * w).astype(o_ref.dtype)


def _ln_kernel_c_on_sublanes(x_ref, w_ref, o_ref, *, inv_c):
    # x_ref: (C, TILE_T)   w_ref: (C, 1)   o_ref: (C, TILE_T)
    # Channels on sublanes, tokens lane-dense -> unmasked 128-wide stores for C < 128.
    x = x_ref[...].astype(jnp.float32)
    w = w_ref[...].astype(jnp.float32)
    s1 = jnp.sum(x, axis=0, keepdims=True)
    s2 = jnp.sum(x * x, axis=0, keepdims=True)
    mean = s1 * inv_c
    var = jnp.maximum(s2 * inv_c - mean * mean, 0.0)
    inv = jax.lax.rsqrt(var + EPS)
    o_ref[...] = (x * inv * w).astype(o_ref.dtype)


# ---------------------------------------------------------------------------
# Tiling helpers / wrappers
# ---------------------------------------------------------------------------

def _pick_tile(n, bytes_per_unit, granularity, target_bytes, cap_units):
    """Largest tile (in 'units' along the tiled axis) within target_bytes,
    multiple of `granularity`, capped, and never exceeding round_up(n)."""
    budget = (target_bytes // max(bytes_per_unit, 1)) // granularity * granularity
    budget = max(granularity, min(budget, cap_units))
    full = _round_up(n, granularity)
    tile = min(budget, full)
    # If everything fits in one block, split into 2 grid steps when it costs no
    # extra padding (keeps both v7x TensorCores busy via dimension_semantics).
    if tile == full and full % (2 * granularity) == 0:
        tile = full // 2
    return tile


def _vmem_limit(block_bytes):
    # x + out, each double-buffered, + weight + margin. Safe on v7x (64 MiB phys).
    return int(min(max(4 * block_bytes + (4 << 20), 32 << 20), 120 << 20))


def _biasfree_ln_c_on_lanes(x2d, weight, *, target_block_bytes):
    """Path A: C % 128 == 0. Layout (rows, C); rows on sublanes, C on lanes."""
    R, C = x2d.shape
    itemsize = x2d.dtype.itemsize
    tile_r = _pick_tile(R, C * itemsize, 16, target_block_bytes, 8192)
    Rp = _round_up(R, tile_r)
    xp = jnp.pad(x2d, ((0, Rp - R), (0, 0))) if Rp != R else x2d
    w2d = weight.reshape(1, C)

    out = pl.pallas_call(
        functools.partial(_ln_kernel_c_on_lanes, inv_c=1.0 / C),
        out_shape=jax.ShapeDtypeStruct((Rp, C), x2d.dtype),
        grid_spec=pltpu.PrefetchScalarGridSpec(
            num_scalar_prefetch=0,
            grid=(Rp // tile_r,),
            in_specs=[
                pl.BlockSpec((tile_r, C), lambda i: (i, 0)),
                pl.BlockSpec((1, C), lambda i: (0, 0)),     # resident weight
            ],
            out_specs=pl.BlockSpec((tile_r, C), lambda i: (i, 0)),
        ),
        compiler_params=pltpu.CompilerParams(
            dimension_semantics=("parallel",),
            vmem_limit_bytes=_vmem_limit(tile_r * C * itemsize),
        ),
    )(xp, w2d)
    return out[:R] if Rp != R else out


def _biasfree_ln_c_on_sublanes(x2d, weight, *, target_block_bytes):
    """Path B: C % 128 != 0 (e.g. C=32/48/96). Transposed layout (C, tokens):
    channels on sublanes, tokens lane-dense (blocks of 128*k tokens)."""
    R, C = x2d.shape
    itemsize = x2d.dtype.itemsize
    tile_t = _pick_tile(R, C * itemsize, 128, target_block_bytes, 32768)
    Rp = _round_up(R, tile_t)

    xt = x2d.T                                   # (C, R) — layout plumbing only
    if Rp != R:
        xt = jnp.pad(xt, ((0, 0), (0, Rp - R)))
    wc = weight.reshape(C, 1)

    out = pl.pallas_call(
        functools.partial(_ln_kernel_c_on_sublanes, inv_c=1.0 / C),
        out_shape=jax.ShapeDtypeStruct((C, Rp), x2d.dtype),
        grid_spec=pltpu.PrefetchScalarGridSpec(
            num_scalar_prefetch=0,
            grid=(Rp // tile_t,),
            in_specs=[
                pl.BlockSpec((C, tile_t), lambda i: (0, i)),
                pl.BlockSpec((C, 1), lambda i: (0, 0)),     # resident weight
            ],
            out_specs=pl.BlockSpec((C, tile_t), lambda i: (0, i)),
        ),
        compiler_params=pltpu.CompilerParams(
            dimension_semantics=("parallel",),
            vmem_limit_bytes=_vmem_limit(C * tile_t * itemsize),
        ),
    )(xt, wc)
    out = out[:, :R] if Rp != R else out
    return out.T


def biasfree_layernorm(x, weight, *, target_block_bytes=4 * 1024 * 1024):
    """x: (..., C). Matches BiasFree_LayerNorm.forward (normalize over last dim)."""
    C = x.shape[-1]
    lead = x.shape[:-1]
    x2d = x.reshape(-1, C)
    if C % 128 == 0:
        out2d = _biasfree_ln_c_on_lanes(x2d, weight,
                                        target_block_bytes=target_block_bytes)
    else:
        out2d = _biasfree_ln_c_on_sublanes(x2d, weight,
                                           target_block_bytes=target_block_bytes)
    return out2d.reshape(*lead, C)


# ---------------------------------------------------------------------------
# Self-test
# ---------------------------------------------------------------------------

def _reference(x, weight):
    xf = x.astype(jnp.float32)
    mean = jnp.mean(xf, axis=-1, keepdims=True)
    var = jnp.mean((xf - mean) ** 2, axis=-1, keepdims=True)
    return (xf / jnp.sqrt(var + EPS) * weight.astype(jnp.float32)).astype(x.dtype)


if __name__ == "__main__":
    key = jax.random.PRNGKey(0)
    k1, k2, k3 = jax.random.split(key, 3)

    # Case 1: typical seg_attn usage — (B, N, C) tokens with small C (< 128)
    B, N, C = 2, 64, 32
    x1 = jax.random.normal(k1, (B, N, C), dtype=jnp.float32)
    w1 = jnp.ones((C,), dtype=jnp.float32)          # module init: weight = ones(C)
    o1 = jax.block_until_ready(biasfree_layernorm(x1, w1))
    assert jnp.allclose(o1, _reference(x1, w1), atol=3e-5, rtol=3e-5), "case1 mismatch"

    # Case 2: lane-aligned channel count (C % 128 == 0) + ragged row count (padding path)
    B2, N2, C2 = 2, 9, 128
    x2 = jax.random.normal(k2, (B2, N2, C2), dtype=jnp.float32)
    w2 = 1.0 + 0.1 * jax.random.normal(k3, (C2,), dtype=jnp.float32)
    o2 = jax.block_until_ready(biasfree_layernorm(x2, w2))
    assert jnp.allclose(o2, _reference(x2, w2), atol=3e-5, rtol=3e-5), "case2 mismatch"

    print("KERNEL_OK")
</pallas_src>

<mosaic_0001>
module attributes {stable_mosaic.version = 11 : i64} {
  func.func @_ln_kernel_c_on_sublanes(%arg0: i32, %arg1: memref<32x128xf32, #tpu.memory_space<vmem>>, %arg2: memref<32x1xf32, #tpu.memory_space<vmem>>, %arg3: memref<32x128xf32, #tpu.memory_space<vmem>>) attributes {dimension_semantics = [#tpu.dimension_semantics<parallel>], iteration_bounds = array<i64: 1>, scalar_prefetch = 0 : i64, scratch_operands = 0 : i64, tpu.core_type = #tpu.core_type<tc>, window_params = [{transform_indices = @transform_0, window_bounds = array<i64: 32, 128>}, {pipeline_mode = #tpu.pipeline_mode<synchronous>, transform_indices = @transform_1, window_bounds = array<i64: 32, 1>}, {transform_indices = @transform_2, window_bounds = array<i64: 32, 128>}]} {
    %c0 = arith.constant 0 : index
    %c0_0 = arith.constant 0 : index
    %0 = vector.load %arg1[%c0, %c0_0] : memref<32x128xf32, #tpu.memory_space<vmem>>, vector<32x128xf32>
    %c0_1 = arith.constant 0 : index
    %c0_2 = arith.constant 0 : index
    %1 = vector.load %arg2[%c0_1, %c0_2] : memref<32x1xf32, #tpu.memory_space<vmem>>, vector<32x1xf32>
    %cst = arith.constant dense<0.000000e+00> : vector<128xf32>
    %2 = vector.multi_reduction <add>, %0, %cst [0] : vector<32x128xf32> to vector<128xf32>
    %3 = vector.shape_cast %2 : vector<128xf32> to vector<1x128xf32>
    %4 = arith.mulf %0, %0 : vector<32x128xf32>
    %cst_3 = arith.constant dense<0.000000e+00> : vector<128xf32>
    %5 = vector.multi_reduction <add>, %4, %cst_3 [0] : vector<32x128xf32> to vector<128xf32>
    %6 = vector.shape_cast %5 : vector<128xf32> to vector<1x128xf32>
    %cst_4 = arith.constant 3.125000e-02 : f32
    %7 = vector.broadcast %cst_4 : f32 to vector<1x128xf32>
    %8 = arith.mulf %3, %7 : vector<1x128xf32>
    %cst_5 = arith.constant 3.125000e-02 : f32
    %9 = vector.broadcast %cst_5 : f32 to vector<1x128xf32>
    %10 = arith.mulf %6, %9 : vector<1x128xf32>
    %11 = arith.mulf %8, %8 : vector<1x128xf32>
    %12 = arith.subf %10, %11 : vector<1x128xf32>
    %cst_6 = arith.constant 0.000000e+00 : f32
    %13 = vector.broadcast %cst_6 : f32 to vector<1x128xf32>
    %14 = arith.maximumf %12, %13 : vector<1x128xf32>
    %cst_7 = arith.constant 9.99999974E-6 : f32
    %15 = vector.broadcast %cst_7 : f32 to vector<1x128xf32>
    %16 = arith.addf %14, %15 : vector<1x128xf32>
    %17 = math.rsqrt %16 : vector<1x128xf32>
    %18 = vector.broadcast %17 : vector<1x128xf32> to vector<32x128xf32>
    %19 = arith.mulf %0, %18 : vector<32x128xf32>
    %20 = vector.broadcast %1 : vector<32x1xf32> to vector<32x128xf32>
    %21 = arith.mulf %19, %20 : vector<32x128xf32>
    %c0_8 = arith.constant 0 : index
    %c0_9 = arith.constant 0 : index
    %22 = vector.load %arg3[%c0_8, %c0_9] : memref<32x128xf32, #tpu.memory_space<vmem>>, vector<32x128xf32>
    tpu.vector_store %arg3[%c0_8, %c0_9], %21 {strides = array<i32>} : memref<32x128xf32, #tpu.memory_space<vmem>>, vector<32x128xf32>,
    return
  }
  func.func @transform_0(%arg0: i32) -> (i32, i32) {
    %c0_i32 = arith.constant 0 : i32
    %c0_i32_0 = arith.constant 0 : i32
    return %c0_i32, %arg0 : i32, i32
  }
  func.func @transform_1(%arg0: i32) -> (i32, i32) {
    %c0_i32 = arith.constant 0 : i32
    %c0_i32_0 = arith.constant 0 : i32
    %c0_i32_1 = arith.constant 0 : i32
    return %c0_i32, %c0_i32_0 : i32, i32
  }
  func.func @transform_2(%arg0: i32) -> (i32, i32) {
    %c0_i32 = arith.constant 0 : i32
    %c0_i32_0 = arith.constant 0 : i32
    return %c0_i32, %arg0 : i32, i32
  }
}

</mosaic_0001>

<llo_original>
// kernel: tpu_custom_call.1
$region0: #{tpu_custom_call.1}
  #allocation0 [shape = 'u32[]', space=smem, size = 0x4, offset = 0x4, fixed_abs, tag = 'smem constant byte address 0x4 - core index']
  #allocation1 [shape = 'u32[144,128]{1,0:T(1,128)}', space=vmem, size = 0x12000, scoped, tag = 'internal scratch']
  %s0 = inlined_call_operand.vmem [shape: f32[32,128], index: 0, kind: input, shape index: {}]
  %s1 = inlined_call_operand.vmem [shape: f32[32,1], index: 1, kind: input, shape index: {}]
  %s2 = inlined_call_operand.hbm [shape: f32[32,128], index: 2, kind: output, shape index: {}]
  %s3 = sld [smem:[#allocation0]]
  $region18: #{tpu_custom_call.1} parent=0
    _
  %s5 = ssub.s32 1, %s3
  %s6 = scalar_select 0, %s5, %s3
  $region1: #{tpu_custom_call.1} parent=0
    #allocation2 [shape = 'u8[16384]{0}', space=vmem, size = 0x4000, scoped, tag = 'output window, operand 0, single buffered']
    #allocation3 [shape = 's32[1]{0}', space=sflag, size = 0x4, scoped, tag = 'scoped memory for tpu_custom_call.1']
    %7 = vsyncpa [#allocation3], 0
    // Predicated region
    $region2: #{tpu_custom_call.1} parent=1 // pred_check
      _
    $region3: #{tpu_custom_call.1} parent=1 // pred_check_branch
      %9 = sbr.rel (0) target = $region5
    $region4: #{tpu_custom_call.1} parent=1 // pred_region
      _
    $region5: #{tpu_custom_call.1} parent=1 // pred_fallthru
      _
    // Predicated region
    $region6: #{tpu_custom_call.1} parent=1 // pred_check
      _
    $region7: #{tpu_custom_call.1} parent=1 // pred_check_branch
      %11 = sbr.rel (0) target = $region9
    $region8: #{tpu_custom_call.1} parent=1 // pred_region
      _
    $region9: #{tpu_custom_call.1} parent=1 // pred_fallthru
      _
    %v12 = vld [vmem:[%s0] sm:$0xff]
    %v13 = vld [vmem:[%s0 + $0x8] sm:$0xff]
    %v14 = vld [vmem:[%s0 + $0x10] sm:$0xff]
    %v15 = vld [vmem:[%s0 + $0x18] sm:$0xff]
    %v16 = vld [vmem:[%s1] sm:$0xff]
    %v17 = vld [vmem:[%s1 + $0x8] sm:$0xff]
    %v18 = vld [vmem:[%s1 + $0x10] sm:$0xff]
    %v19 = vld [vmem:[%s1 + $0x18] sm:$0xff]
    %v20 = vadd.f32 %v12, %v13
    %v21 = vadd.f32 %v20, %v14
    %v22 = vadd.f32 %v21, %v15
    %v23 = vrot.slane %v22, 4
    %v24 = vadd.f32 %v22, %v23
    %v25 = vrot.slane %v24, 2
    %v26 = vadd.f32 %v24, %v25
    %v27 = vrot.slane %v26, 1
    %v28 = vadd.f32 %v26, %v27
    %v29 = vmul.f32 %v12, %v12
    %v30 = vmul.f32 %v13, %v13
    %v31 = vmul.f32 %v14, %v14
    %v32 = vmul.f32 %v15, %v15
    %v33 = vadd.f32 %v29, %v30
    %v34 = vadd.f32 %v33, %v31
    %v35 = vadd.f32 %v34, %v32
    %v36 = vrot.slane %v35, 4
    %v37 = vadd.f32 %v35, %v36
    %v38 = vrot.slane %v37, 2
    %v39 = vadd.f32 %v37, %v38
    %v40 = vrot.slane %v39, 1
    %v41 = vadd.f32 %v39, %v40
    %v42 = vmul.f32 %v28, 0.03125
    %v43 = vmul.f32 %v41, 0.03125
    %v44 = vmul.f32 %v42, %v42
    %v45 = vsub.f32 %v43, %v44
    %v46 = vmax.f32 %v45, 0.0
    %v47 = vadd.f32 %v46, 1e-05
    %v48 = vrsqrt.pop %v47
    %v49 = vmul.f32 %v12, %v48
    %v50 = vmul.f32 %v13, %v48
    %v51 = vmul.f32 %v14, %v48
    %v52 = vmul.f32 %v15, %v48
    %54 = vset.pattern.permute.xlu0 0
    %55 = vperm.xlu0 %54, %v16
    %v56 = vpop.permute.xlu0 %55
    %59 = vset.pattern.permute.xlu0 0
    %60 = vperm.xlu0 %59, %v17
    %v61 = vpop.permute.xlu0 %60
    %64 = vset.pattern.permute.xlu0 0
    %65 = vperm.xlu0 %64, %v18
    %v66 = vpop.permute.xlu0 %65
    %69 = vset.pattern.permute.xlu0 0
    %70 = vperm.xlu0 %69, %v19
    %v71 = vpop.permute.xlu0 %70
    %v73 = vmul.f32 %v49, %v56
    %v74 = vmul.f32 %v50, %v61
    %v75 = vmul.f32 %v51, %v66
    %v76 = vmul.f32 %v52, %v71
    %77 = vst [vmem:[#allocation2] sm:$0xff] %v73
    %78 = vst [vmem:[#allocation2 + $0x8] sm:$0xff] %v74
    %79 = vst [vmem:[#allocation2 + $0x10] sm:$0xff] %v75
    %80 = vst [vmem:[#allocation2 + $0x18] sm:$0xff] %v76
    // Predicated region
    $region10: #{tpu_custom_call.1} parent=1 // pred_check
      _
    $region11: #{tpu_custom_call.1} parent=1 // pred_check_branch
      %82 = sbr.rel (0) target = $region13
    $region12: #{tpu_custom_call.1} parent=1 // pred_region
      %s84 = ssub.s32 512, 512
      %85 = vsyncadd [#allocation3], %s84
      %s86 = sshll.u32 [#allocation2], 4
      %s87 = int_to_ptr.vmem [resolvable:$true] %s86
      %92 = dma.vmem_to_hbm [thread:$0]  %s87, 512, %s2, [#allocation3], 128, 128, 8
    $region13: #{tpu_custom_call.1} parent=1 // pred_fallthru
      _
    // Predicated region
    $region14: #{tpu_custom_call.1} parent=1 // pred_check
      _
    $region15: #{tpu_custom_call.1} parent=1 // pred_check_branch
      %94 = sbr.rel (0) target = $region17
    $region16: #{tpu_custom_call.1} parent=1 // pred_region
      %95 = dma.done [#allocation3], 512
    $region17: #{tpu_custom_call.1} parent=1 // pred_fallthru
      _
    %96 = vsyncpa [#allocation3], 1

</llo_original>
